<compile_context>
chip_gen: v7x
topology: tpu7x:2x2x1
jax: 0.10.0
libtpu: 0.0.40
codegen_flags: <defaults>
</compile_context>

<pallas_src>
import jax
import jax.numpy as jnp
from jax.experimental import pallas as pl
from jax.experimental.pallas import tpu as pltpu


def _double_conv1x1_kernel(w_ref, b_ref, x_ref, o_ref):
    # w_ref, b_ref: (1,) scalars in SMEM.  x_ref / o_ref: elementwise tiles in VMEM.
    w = w_ref[0]
    b = b_ref[0]
    # Fold the two affine maps on the scalar unit (free); one multiply-add per vreg.
    w2 = w * w
    b2 = w * b + b
    o_ref[...] = x_ref[...] * w2 + b2


def _dim_semantics(ngrid):
    """CORE_PARALLEL on v7x (2 TensorCores/chip) so the row grid shards across cores."""
    try:
        kind = jax.devices()[0].device_kind.lower()
    except Exception:
        kind = ""
    if "v7" in kind or "tpu7" in kind:
        return (pltpu.CORE_PARALLEL,) * ngrid
    return ("parallel",) * ngrid


def module_for_test_forward(x, weight, bias, *, lane=2048, tile_rows=512,
                            single_block_max=16384):
    """ModuleForTest.forward: conv2d(conv2d(x)) with nn.Conv2d(1, 1, 1).

    x: (N, 1, H, W) float32; weight: (1, 1, 1, 1); bias: (1,).
    """
    # TODO(synk): the torch module's `cached_tensor` bookkeeping (store + a
    # non-inplace unsqueeze on the next call) never affects the returned value,
    # so it has no kernel equivalent and is omitted.
    n, c, h, w = x.shape
    assert c == 1, "Conv2d(1, 1, 1) expects a single input channel"

    total = n * c * h * w
    w_scalar = weight.reshape(1).astype(jnp.float32)
    b_scalar = bias.reshape(1).astype(jnp.float32)

    bytes_rw = 2 * total * x.dtype.itemsize
    cost = pl.CostEstimate(flops=2 * total, transcendentals=0,
                           bytes_accessed=bytes_rw)

    scalar_specs = [
        pl.BlockSpec(memory_space=pltpu.MemorySpace.SMEM),   # weight scalar
        pl.BlockSpec(memory_space=pltpu.MemorySpace.SMEM),   # bias scalar
    ]

    # ---- Tiny-input fast path: one no-grid call, no pad / reshape / slice. ----
    if total <= single_block_max:
        return pl.pallas_call(
            _double_conv1x1_kernel,
            out_shape=jax.ShapeDtypeStruct(x.shape, x.dtype),
            in_specs=scalar_specs
                     + [pl.BlockSpec(memory_space=pltpu.MemorySpace.VMEM)],
            out_specs=pl.BlockSpec(memory_space=pltpu.MemorySpace.VMEM),
            cost_estimate=cost,
        )(w_scalar, b_scalar, x)

    # ---- General path: lane-dense (rows, L) slab, row-tiled 1-D grid. ----
    L = lane                                    # multiple of 128 -> unmasked lane-dense stores
    rows = pl.cdiv(total, L)
    padded_total = rows * L
    flat = x.reshape(total)
    if padded_total != total:                   # pad only the < L tail; skipped when aligned
        flat = jnp.pad(flat, (0, padded_total - total))
    x2d = flat.reshape(rows, L)

    if rows <= tile_rows:
        tm = rows                               # one block covers the full row dim
    else:
        tm = tile_rows                          # multiple of 8; ragged last block is masked
    grid = (pl.cdiv(rows, tm),)

    out2d = pl.pallas_call(
        _double_conv1x1_kernel,
        out_shape=jax.ShapeDtypeStruct(x2d.shape, x2d.dtype),
        grid=grid,
        in_specs=scalar_specs + [pl.BlockSpec((tm, L), lambda i: (i, 0))],
        out_specs=pl.BlockSpec((tm, L), lambda i: (i, 0)),
        compiler_params=pltpu.CompilerParams(
            dimension_semantics=_dim_semantics(1),
            vmem_limit_bytes=32 * 1024 * 1024,  # 2x(in+out) 4 MiB tiles = 16 MiB used
        ),
        cost_estimate=cost,
    )(w_scalar, b_scalar, x2d)

    if padded_total != total:
        return out2d.reshape(padded_total)[:total].reshape(n, c, h, w)
    return out2d.reshape(n, c, h, w)


if __name__ == "__main__":
    key = jax.random.PRNGKey(0)
    kx, kx2, kw, kb = jax.random.split(key, 4)

    # Deterministic parameters (shapes from nn.Conv2d(1, 1, 1)).
    weight = jax.random.uniform(kw, (1, 1, 1, 1), jnp.float32, -1.0, 1.0)
    bias = jax.random.uniform(kb, (1,), jnp.float32, -1.0, 1.0)
    ws = weight[0, 0, 0, 0]
    bs = bias[0]

    # Small input consistent with Conv2d(in_channels=1): exercises the
    # no-grid fast path (512 elements).
    x = jax.random.normal(kx, (2, 1, 16, 16), jnp.float32)
    out = jax.block_until_ready(module_for_test_forward(x, weight, bias))
    ref = (x * ws + bs) * ws + bs
    assert out.shape == x.shape and out.dtype == x.dtype
    assert jnp.allclose(out, ref, atol=1e-5, rtol=1e-5)

    # Second small input forced down the tiled-grid path with a ragged last
    # block, to validate the general path's masking without a huge tensor.
    x2 = jax.random.normal(kx2, (2, 1, 40, 48), jnp.float32)   # 3840 elements
    out2 = jax.block_until_ready(
        module_for_test_forward(x2, weight, bias,
                                lane=128, tile_rows=8, single_block_max=0))
    ref2 = (x2 * ws + bs) * ws + bs
    assert out2.shape == x2.shape and out2.dtype == x2.dtype
    assert jnp.allclose(out2, ref2, atol=1e-5, rtol=1e-5)

    print("KERNEL_OK")
</pallas_src>

<mosaic_0001>
module attributes {stable_mosaic.version = 11 : i64} {
  func.func @_double_conv1x1_kernel(%arg0: memref<1xf32, #tpu.memory_space<smem>>, %arg1: memref<1xf32, #tpu.memory_space<smem>>, %arg2: memref<2x1x16x16xf32, #tpu.memory_space<vmem>>, %arg3: memref<2x1x16x16xf32, #tpu.memory_space<vmem>>) attributes {dimension_semantics = [], scalar_prefetch = 0 : i64, scratch_operands = 0 : i64, tpu.core_type = #tpu.core_type<tc>} {
    %c0 = arith.constant 0 : index
    %0 = memref.load %arg0[%c0] : memref<1xf32, #tpu.memory_space<smem>>
    %c0_0 = arith.constant 0 : index
    %1 = memref.load %arg1[%c0_0] : memref<1xf32, #tpu.memory_space<smem>>
    %2 = arith.mulf %0, %0 : f32
    %3 = arith.mulf %0, %1 : f32
    %4 = arith.addf %3, %1 : f32
    %c0_1 = arith.constant 0 : index
    %c0_2 = arith.constant 0 : index
    %c0_3 = arith.constant 0 : index
    %c0_4 = arith.constant 0 : index
    %5 = vector.load %arg2[%c0_1, %c0_2, %c0_3, %c0_4] : memref<2x1x16x16xf32, #tpu.memory_space<vmem>>, vector<2x1x16x16xf32>
    %6 = vector.broadcast %2 : f32 to vector<2x1x16x16xf32>
    %7 = arith.mulf %5, %6 : vector<2x1x16x16xf32>
    %8 = vector.broadcast %4 : f32 to vector<2x1x16x16xf32>
    %9 = arith.addf %7, %8 : vector<2x1x16x16xf32>
    %c0_5 = arith.constant 0 : index
    %c0_6 = arith.constant 0 : index
    %c0_7 = arith.constant 0 : index
    %c0_8 = arith.constant 0 : index
    %10 = vector.load %arg3[%c0_5, %c0_6, %c0_7, %c0_8] : memref<2x1x16x16xf32, #tpu.memory_space<vmem>>, vector<2x1x16x16xf32>
    tpu.vector_store %arg3[%c0_5, %c0_6, %c0_7, %c0_8], %9 {strides = array<i32>} : memref<2x1x16x16xf32, #tpu.memory_space<vmem>>, vector<2x1x16x16xf32>,
    return
  }
}

</mosaic_0001>

<llo_original>
// kernel: tpu_custom_call.1
$region0: #{tpu_custom_call.1}
  #allocation0 [shape = 'u32[]', space=smem, size = 0x4, offset = 0x4, fixed_abs, tag = 'smem constant byte address 0x4 - core index']
  #allocation1 [shape = 'u32[144,128]{1,0:T(1,128)}', space=vmem, size = 0x12000, scoped, tag = 'internal scratch']
  #allocation2 [shape = 'f32[1]{0:T(128)S(6)}', space=smem, size = 0x200, scoped, tag = 'scoped memory for tpu_custom_call.1']
  #allocation3 [shape = 'f32[1]{0:T(128)S(6)}', space=smem, size = 0x200, scoped, tag = 'scoped memory for tpu_custom_call.1']
  %s0 = inlined_call_operand.<no memory space> [shape: f32[1], index: 0, kind: input, shape index: {}]
  %s1 = inlined_call_operand.<no memory space> [shape: f32[1], index: 1, kind: input, shape index: {}]
  %s2 = inlined_call_operand.hbm [shape: f32[2,1,16,16], index: 2, kind: input, shape index: {}]
  %s3 = inlined_call_operand.hbm [shape: f32[2,1,16,16], index: 3, kind: output, shape index: {}]
  %s4 = sld [smem:[#allocation0]]
  $region26: #{tpu_custom_call.1} parent=0
    _
  %s6 = ssub.s32 1, %s4
  %s7 = scalar_select 0, %s6, %s4
  %8 = sst [smem:[#allocation2]] %s0
  %9 = sst [smem:[#allocation3]] %s1
  $region1: #{tpu_custom_call.1} parent=0
    #allocation4 [shape = 'u8[16384]{0}', space=vmem, size = 0x4000, scoped, tag = 'input window, operand 2, single buffered']
    #allocation5 [shape = 's32[1]{0}', space=sflag, size = 0x4, scoped, tag = 'scoped memory for tpu_custom_call.1']
    #allocation6 [shape = 's32[1]{0}', space=sflag, size = 0x4, scoped, tag = 'scoped memory for tpu_custom_call.1']
    #allocation7 [shape = 'u8[16384]{0}', space=vmem, size = 0x4000, scoped, tag = 'output window, operand 0, single buffered']
    %10 = vsyncpa [#allocation5], 0
    %11 = vsyncpa [#allocation6], 0
    // Predicated region
    $region2: #{tpu_custom_call.1} parent=1 // pred_check
      _
    $region3: #{tpu_custom_call.1} parent=1 // pred_check_branch
      %13 = sbr.rel (0) target = $region5
    $region4: #{tpu_custom_call.1} parent=1 // pred_region
      _
    $region5: #{tpu_custom_call.1} parent=1 // pred_fallthru
      _
    // Predicated region
    $region6: #{tpu_custom_call.1} parent=1 // pred_check
      _
    $region7: #{tpu_custom_call.1} parent=1 // pred_check_branch
      %15 = sbr.rel (0) target = $region9
    $region8: #{tpu_custom_call.1} parent=1 // pred_region
      _
    $region9: #{tpu_custom_call.1} parent=1 // pred_fallthru
      _
    // Predicated region
    $region10: #{tpu_custom_call.1} parent=1 // pred_check
      _
    $region11: #{tpu_custom_call.1} parent=1 // pred_check_branch
      %17 = sbr.rel (0) target = $region13
    $region12: #{tpu_custom_call.1} parent=1 // pred_region
      %s19 = ssub.s32 512, 512
      %20 = vsyncadd [#allocation5], %s19
      %s21 = sshll.u32 [#allocation4], 4
      %s22 = int_to_ptr.vmem [resolvable:$true] %s21
      %27 = dma.hbm_to_vmem [thread:$0]  %s2, 512, %s22, [#allocation5], 128, 128, 8
    $region13: #{tpu_custom_call.1} parent=1 // pred_fallthru
      _
    // Predicated region
    $region14: #{tpu_custom_call.1} parent=1 // pred_check
      _
    $region15: #{tpu_custom_call.1} parent=1 // pred_check_branch
      %29 = sbr.rel (0) target = $region17
    $region16: #{tpu_custom_call.1} parent=1 // pred_region
      %30 = dma.done [#allocation5], 512
    $region17: #{tpu_custom_call.1} parent=1 // pred_fallthru
      _
    %s31 = sld [smem:[#allocation2]]
    %s32 = sld [smem:[#allocation3]]
    %s33 = smul.f32 %s31, %s31
    %s34 = smul.f32 %s31, %s32
    %s35 = sadd.f32 %s34, %s32
    %v36 = vld [vmem:[#allocation4] sm:$0xff]
    %v37 = vld [vmem:[#allocation4 + $0x8] sm:$0xff]
    %v38 = vld [vmem:[#allocation4 + $0x10] sm:$0xff]
    %v39 = vld [vmem:[#allocation4 + $0x18] sm:$0xff]
    %v40 = vstv %s33
    %v41 = vmul.f32 %v36, %v40
    %v42 = vmul.f32 %v37, %v40
    %v43 = vmul.f32 %v38, %v40
    %v44 = vmul.f32 %v39, %v40
    %v45 = vstv %s35
    %v46 = vadd.f32 %v41, %v45
    %v47 = vadd.f32 %v42, %v45
    %v48 = vadd.f32 %v43, %v45
    %v49 = vadd.f32 %v44, %v45
    %vm50 = vcmask 130048
    %51 = vst.msk [vmem:[#allocation7] sm:$0xff] %vm50, %v46
    %52 = vst.msk [vmem:[#allocation7 + $0x8] sm:$0xff] %vm50, %v47
    %53 = vst.msk [vmem:[#allocation7 + $0x10] sm:$0xff] %vm50, %v48
    %54 = vst.msk [vmem:[#allocation7 + $0x18] sm:$0xff] %vm50, %v49
    // Predicated region
    $region18: #{tpu_custom_call.1} parent=1 // pred_check
      _
    $region19: #{tpu_custom_call.1} parent=1 // pred_check_branch
      %56 = sbr.rel (0) target = $region21
    $region20: #{tpu_custom_call.1} parent=1 // pred_region
      %s58 = ssub.s32 512, 512
      %59 = vsyncadd [#allocation6], %s58
      %s60 = sshll.u32 [#allocation7], 4
      %s61 = int_to_ptr.vmem [resolvable:$true] %s60
      %66 = dma.vmem_to_hbm [thread:$0]  %s61, 512, %s3, [#allocation6], 128, 128, 8
    $region21: #{tpu_custom_call.1} parent=1 // pred_fallthru
      _
    // Predicated region
    $region22: #{tpu_custom_call.1} parent=1 // pred_check
      _
    $region23: #{tpu_custom_call.1} parent=1 // pred_check_branch
      %68 = sbr.rel (0) target = $region25
    $region24: #{tpu_custom_call.1} parent=1 // pred_region
      %69 = dma.done [#allocation6], 512
    $region25: #{tpu_custom_call.1} parent=1 // pred_fallthru
      _
    %70 = vsyncpa [#allocation5], 1
    %71 = vsyncpa [#allocation6], 1

</llo_original>
